<compile_context>
chip_gen: v5e
topology: v5e:2x2
jax: 0.10.0
libtpu: 0.0.40
codegen_flags: <defaults>
</compile_context>

<pallas_src>
import jax
import jax.numpy as jnp
from jax.experimental import pallas as pl
from jax.experimental.pallas import tpu as pltpu


LANE = 128      # TPU lane width (last-dim tiling unit)
SUBLANE = 8     # TPU sublane width (second-to-last dim tiling unit)


def _round_up(n, m):
    return ((n + m - 1) // m) * m


def soft_exponential(x, alpha):
    """SoftExponential activation. `alpha` is a static Python float, matching the
    Python-level branch on the scalar parameter in the PyTorch implementation.
    Computed in f32 (v5e VPU/EUP have no bf16 path)."""
    if alpha == 0.0:
        return x
    elif alpha < 0.0:
        # NOTE: inherits the reference's domain (log argument must stay > 0).
        return -jnp.log(1.0 - alpha * (x + alpha)) / alpha
    else:
        return (jnp.exp(alpha * x) - 1.0) / alpha + alpha


def make_mlp_kernel(alphas, compute_dtype):
    """Fused MLP: (nhidden+1) Linear layers, SoftExponential between them,
    Identity after the last layer.

    Kernel refs:
      x_ref : (batch_tile, P)  compute_dtype (bf16)  zero-padded features
      w_ref : (L, P, P)        compute_dtype (bf16)  packed zero-padded weights
      b_ref : (L, P)           float32               packed zero-padded biases
      o_ref : (batch_tile, P)  float32               lane-dense padded output

    The zero padding is self-consistent: padded activation lanes pick up the
    nonzero SoftExponential(0) constant, but they only ever multiply zero-padded
    weight rows of the next layer, so the real output columns stay exact.
    """
    n_layers = len(alphas) + 1

    def kernel(x_ref, w_ref, b_ref, o_ref):
        h = x_ref[...]                                    # (bt, P) bf16
        for k in range(n_layers):                         # static unrolled loop
            w = w_ref[k]                                  # (P, P) bf16, VMEM-resident
            b = b_ref[k:k + 1, :]                         # (1, P) f32
            # bf16 x bf16 -> f32 accumulate on the MXU.
            h = jnp.dot(h, w, preferred_element_type=jnp.float32) + b
            if k < n_layers - 1:                          # last nonlin is nn.Identity()
                h = soft_exponential(h, alphas[k])        # f32 elementwise
                h = h.astype(compute_dtype)               # bf16 for the next MXU pass
        o_ref[...] = h.astype(o_ref.dtype)                # lane-dense f32 store

    return kernel


def pack_params(weights, biases, padded_dim, compute_dtype):
    """Pack all layers into one zero-padded weight slab and one bias slab."""
    n_layers = len(weights)
    w_packed = jnp.zeros((n_layers, padded_dim, padded_dim), compute_dtype)
    b_packed = jnp.zeros((n_layers, padded_dim), jnp.float32)
    for k, (w, b) in enumerate(zip(weights, biases)):
        fi, fo = w.shape
        w_packed = w_packed.at[k, :fi, :fo].set(w.astype(compute_dtype))
        b_packed = b_packed.at[k, :fo].set(b.reshape(-1).astype(jnp.float32))
    return w_packed, b_packed


def mlp_forward(x, weights, biases, alphas, *, batch_tile=256,
                compute_dtype=jnp.bfloat16, vmem_limit_bytes=32 * 1024 * 1024):
    """Fused MLP forward.

    x       : [B, insize]
    weights : list of (in_k, out_k) arrays (transpose of torch.nn.Linear layout)
    biases  : list of (1, out_k) arrays
    alphas  : list of static floats, one per hidden layer (SoftExponential alpha)
    """
    B, insize = x.shape
    n_layers = len(weights)
    outsize = weights[-1].shape[1]
    dims = [weights[0].shape[0]] + [w.shape[1] for w in weights]
    assert dims[0] == insize

    # Common lane-dense padded feature width (>= 128, multiple of 128).
    P = max(_round_up(d, LANE) for d in dims)

    # Batch tiling: large tiles amortize per-step overhead; small batches collapse
    # to a single sublane-aligned tile.
    bt = max(SUBLANE, min(batch_tile, _round_up(B, SUBLANE)))
    B_pad = _round_up(B, bt)
    grid = (B_pad // bt,)

    # Pack + pad operands (zero padding; see kernel docstring for why it is exact).
    w_packed, b_packed = pack_params(weights, biases, P, compute_dtype)
    x_pad = jnp.zeros((B_pad, P), compute_dtype).at[:B, :insize].set(
        x.astype(compute_dtype))

    kernel = make_mlp_kernel(tuple(float(a) for a in alphas), compute_dtype)

    bytes_accessed = (x_pad.size * x_pad.dtype.itemsize
                      + w_packed.size * w_packed.dtype.itemsize
                      + b_packed.size * b_packed.dtype.itemsize
                      + B_pad * P * 4)
    cost = pl.CostEstimate(
        flops=2 * B_pad * n_layers * P * P,
        transcendentals=B_pad * (n_layers - 1) * P,
        bytes_accessed=bytes_accessed,
    )

    out_padded = pl.pallas_call(
        kernel,
        out_shape=jax.ShapeDtypeStruct((B_pad, P), jnp.float32),
        grid_spec=pltpu.PrefetchScalarGridSpec(
            num_scalar_prefetch=0,
            grid=grid,
            in_specs=[
                pl.BlockSpec((bt, P), lambda i: (i, 0)),               # x tile
                pl.BlockSpec((n_layers, P, P), lambda i: (0, 0, 0)),   # packed W (resident)
                pl.BlockSpec((n_layers, P), lambda i: (0, 0)),         # packed b (resident)
            ],
            out_specs=pl.BlockSpec((bt, P), lambda i: (i, 0)),
        ),
        compiler_params=pltpu.CompilerParams(
            dimension_semantics=("parallel",),
            vmem_limit_bytes=vmem_limit_bytes,
        ),
        cost_estimate=cost,
    )(x_pad, w_packed, b_packed)

    # Strip batch and lane padding.
    return out_padded[:B, :outsize]


def mlp_reference(x, weights, biases, alphas, compute_dtype=jnp.bfloat16):
    """Pure-JAX reference with the same numerics as the kernel
    (bf16 MXU operands, f32 accumulation, f32 SoftExponential)."""
    h = x.astype(compute_dtype)
    n_layers = len(weights)
    for k, (w, b) in enumerate(zip(weights, biases)):
        h = jnp.dot(h, w.astype(compute_dtype),
                    preferred_element_type=jnp.float32) + b.astype(jnp.float32)
        if k < n_layers - 1:
            h = soft_exponential(h, alphas[k]).astype(compute_dtype)
    return h.astype(jnp.float32)


def init_params(key, sizes):
    """Deterministic init matching torch.nn.Linear's U(-1/sqrt(in), 1/sqrt(in))."""
    weights, biases = [], []
    for k in range(len(sizes) - 1):
        fan_in, fan_out = sizes[k], sizes[k + 1]
        key, kw, kb = jax.random.split(key, 3)
        bound = 1.0 / jnp.sqrt(jnp.float32(fan_in))
        w = jax.random.uniform(kw, (fan_in, fan_out), jnp.float32, -bound, bound)
        b = jax.random.uniform(kb, (1, fan_out), jnp.float32, -bound, bound)
        weights.append(w)
        biases.append(b)
    return weights, biases


if __name__ == "__main__":
    # Module config: MLP(insize=8, outsize=4, hsizes=[32, 32]).
    # Batch chosen so the grid has 2 parallel 256-row tiles (v7x dual-TC friendly).
    insize, outsize = 8, 4
    hsizes = [32, 32]
    batch = 512

    sizes = [insize] + hsizes + [outsize]

    key = jax.random.PRNGKey(0)
    key, kx = jax.random.split(key)
    x = jax.random.normal(kx, (batch, insize), jnp.float32)

    weights, biases = init_params(key, sizes)

    # SoftExponential alpha parameters (one per hidden layer), chosen nonzero to
    # exercise both formula branches (PyTorch default init alpha=0.0 == identity).
    alphas = [0.3, -0.25]

    out = mlp_forward(x, weights, biases, alphas, batch_tile=256)
    out = jax.block_until_ready(out)

    ref = mlp_reference(x, weights, biases, alphas)
    assert out.shape == (batch, outsize)
    assert jnp.allclose(out, ref, atol=1e-4, rtol=1e-4), "mismatch vs reference"

    print("KERNEL_OK")
</pallas_src>

<mosaic_0001>
module attributes {stable_mosaic.version = 11 : i64} {
  func.func @kernel(%arg0: i32, %arg1: memref<256x128xbf16, #tpu.memory_space<vmem>>, %arg2: memref<3x128x128xbf16, #tpu.memory_space<vmem>>, %arg3: memref<3x128xf32, #tpu.memory_space<vmem>>, %arg4: memref<256x128xf32, #tpu.memory_space<vmem>>) attributes {dimension_semantics = [#tpu.dimension_semantics<parallel>], iteration_bounds = array<i64: 2>, scalar_prefetch = 0 : i64, scratch_operands = 0 : i64, tpu.core_type = #tpu.core_type<tc>, window_params = [{transform_indices = @transform_0, window_bounds = array<i64: 256, 128>}, {pipeline_mode = #tpu.pipeline_mode<synchronous>, transform_indices = @transform_1, window_bounds = array<i64: 3, 128, 128>}, {pipeline_mode = #tpu.pipeline_mode<synchronous>, transform_indices = @transform_2, window_bounds = array<i64: 3, 128>}, {transform_indices = @transform_3, window_bounds = array<i64: 256, 128>}]} {
    %c0 = arith.constant 0 : index
    %c0_0 = arith.constant 0 : index
    %0 = vector.load %arg1[%c0, %c0_0] : memref<256x128xbf16, #tpu.memory_space<vmem>>, vector<256x128xbf16>
    %c0_1 = arith.constant 0 : index
    %c0_2 = arith.constant 0 : index
    %c0_3 = arith.constant 0 : index
    %1 = vector.load %arg2[%c0_1, %c0_2, %c0_3] : memref<3x128x128xbf16, #tpu.memory_space<vmem>>, vector<1x128x128xbf16>
    %2 = vector.shape_cast %1 : vector<1x128x128xbf16> to vector<128x128xbf16>
    %c0_4 = arith.constant 0 : index
    %c0_5 = arith.constant 0 : index
    %3 = vector.load %arg3[%c0_4, %c0_5] : memref<3x128xf32, #tpu.memory_space<vmem>>, vector<1x128xf32>
    %cst = arith.constant dense<0.000000e+00> : vector<256x128xf32>
    %4 = tpu.matmul %0, %2, %cst {dimension_numbers = #tpu.dot_dimension_numbers<[1], [0], [0], [1], [0, 0, 1, 1], [], []>} : vector<256x128xbf16>, vector<128x128xbf16>, vector<256x128xf32> -> vector<256x128xf32>
    %5 = vector.broadcast %3 : vector<1x128xf32> to vector<256x128xf32>
    %6 = arith.addf %4, %5 : vector<256x128xf32>
    %cst_6 = arith.constant 3.000000e-01 : f32
    %7 = vector.broadcast %cst_6 : f32 to vector<256x128xf32>
    %8 = arith.mulf %7, %6 : vector<256x128xf32>
    %9 = math.exp %8 : vector<256x128xf32>
    %cst_7 = arith.constant 1.000000e+00 : f32
    %10 = vector.broadcast %cst_7 : f32 to vector<256x128xf32>
    %11 = arith.subf %9, %10 : vector<256x128xf32>
    %cst_8 = arith.constant 3.000000e-01 : f32
    %12 = vector.broadcast %cst_8 : f32 to vector<256x128xf32>
    %13 = arith.divf %11, %12 : vector<256x128xf32>
    %cst_9 = arith.constant 3.000000e-01 : f32
    %14 = vector.broadcast %cst_9 : f32 to vector<256x128xf32>
    %15 = arith.addf %13, %14 : vector<256x128xf32>
    %16 = arith.truncf %15 : vector<256x128xf32> to vector<256x128xbf16>
    %c1 = arith.constant 1 : index
    %c0_10 = arith.constant 0 : index
    %c0_11 = arith.constant 0 : index
    %17 = vector.load %arg2[%c1, %c0_10, %c0_11] : memref<3x128x128xbf16, #tpu.memory_space<vmem>>, vector<1x128x128xbf16>
    %18 = vector.shape_cast %17 : vector<1x128x128xbf16> to vector<128x128xbf16>
    %c1_12 = arith.constant 1 : index
    %c0_13 = arith.constant 0 : index
    %19 = vector.load %arg3[%c1_12, %c0_13] : memref<3x128xf32, #tpu.memory_space<vmem>>, vector<1x128xf32>
    %cst_14 = arith.constant dense<0.000000e+00> : vector<256x128xf32>
    %20 = tpu.matmul %16, %18, %cst_14 {dimension_numbers = #tpu.dot_dimension_numbers<[1], [0], [0], [1], [0, 0, 1, 1], [], []>} : vector<256x128xbf16>, vector<128x128xbf16>, vector<256x128xf32> -> vector<256x128xf32>
    %21 = vector.broadcast %19 : vector<1x128xf32> to vector<256x128xf32>
    %22 = arith.addf %20, %21 : vector<256x128xf32>
    %cst_15 = arith.constant -2.500000e-01 : f32
    %23 = vector.broadcast %cst_15 : f32 to vector<256x128xf32>
    %24 = arith.addf %22, %23 : vector<256x128xf32>
    %cst_16 = arith.constant -2.500000e-01 : f32
    %25 = vector.broadcast %cst_16 : f32 to vector<256x128xf32>
    %26 = arith.mulf %25, %24 : vector<256x128xf32>
    %cst_17 = arith.constant 1.000000e+00 : f32
    %27 = vector.broadcast %cst_17 : f32 to vector<256x128xf32>
    %28 = arith.subf %27, %26 : vector<256x128xf32>
    %29 = math.log %28 : vector<256x128xf32>
    %cst_18 = arith.constant 0.000000e+00 : f32
    %30 = vector.broadcast %cst_18 : f32 to vector<256x128xf32>
    %31 = arith.subf %30, %29 : vector<256x128xf32>
    %cst_19 = arith.constant -2.500000e-01 : f32
    %32 = vector.broadcast %cst_19 : f32 to vector<256x128xf32>
    %33 = arith.divf %31, %32 : vector<256x128xf32>
    %34 = arith.truncf %33 : vector<256x128xf32> to vector<256x128xbf16>
    %c2 = arith.constant 2 : index
    %c0_20 = arith.constant 0 : index
    %c0_21 = arith.constant 0 : index
    %35 = vector.load %arg2[%c2, %c0_20, %c0_21] : memref<3x128x128xbf16, #tpu.memory_space<vmem>>, vector<1x128x128xbf16>
    %36 = vector.shape_cast %35 : vector<1x128x128xbf16> to vector<128x128xbf16>
    %c2_22 = arith.constant 2 : index
    %c0_23 = arith.constant 0 : index
    %37 = vector.load %arg3[%c2_22, %c0_23] : memref<3x128xf32, #tpu.memory_space<vmem>>, vector<1x128xf32>
    %cst_24 = arith.constant dense<0.000000e+00> : vector<256x128xf32>
    %38 = tpu.matmul %34, %36, %cst_24 {dimension_numbers = #tpu.dot_dimension_numbers<[1], [0], [0], [1], [0, 0, 1, 1], [], []>} : vector<256x128xbf16>, vector<128x128xbf16>, vector<256x128xf32> -> vector<256x128xf32>
    %39 = vector.broadcast %37 : vector<1x128xf32> to vector<256x128xf32>
    %40 = arith.addf %38, %39 : vector<256x128xf32>
    %c0_25 = arith.constant 0 : index
    %c0_26 = arith.constant 0 : index
    %41 = vector.load %arg4[%c0_25, %c0_26] : memref<256x128xf32, #tpu.memory_space<vmem>>, vector<256x128xf32>
    tpu.vector_store %arg4[%c0_25, %c0_26], %40 {strides = array<i32>} : memref<256x128xf32, #tpu.memory_space<vmem>>, vector<256x128xf32>,
    return
  }
  func.func @transform_0(%arg0: i32) -> (i32, i32) {
    %c0_i32 = arith.constant 0 : i32
    %c0_i32_0 = arith.constant 0 : i32
    return %arg0, %c0_i32 : i32, i32
  }
  func.func @transform_1(%arg0: i32) -> (i32, i32, i32) {
    %c0_i32 = arith.constant 0 : i32
    %c0_i32_0 = arith.constant 0 : i32
    %c0_i32_1 = arith.constant 0 : i32
    %c0_i32_2 = arith.constant 0 : i32
    return %c0_i32, %c0_i32_0, %c0_i32_1 : i32, i32, i32
  }
  func.func @transform_2(%arg0: i32) -> (i32, i32) {
    %c0_i32 = arith.constant 0 : i32
    %c0_i32_0 = arith.constant 0 : i32
    %c0_i32_1 = arith.constant 0 : i32
    return %c0_i32, %c0_i32_0 : i32, i32
  }
  func.func @transform_3(%arg0: i32) -> (i32, i32) {
    %c0_i32 = arith.constant 0 : i32
    %c0_i32_0 = arith.constant 0 : i32
    return %arg0, %c0_i32 : i32, i32
  }
}

</mosaic_0001>

<llo_original>
// kernel: tpu_custom_call.1
$region0: #{tpu_custom_call.1}
  #allocation0 [shape = 'u32[]', space=smem, size = 0x4, offset = 0x4, fixed_abs, tag = 'smem constant byte address 0x4 - core index']
  #allocation1 [shape = 'u32[72,128]{1,0:T(1,128)}', space=vmem, size = 0x9000, scoped, tag = 'internal scratch']
  %s0 = inlined_call_operand.hbm [shape: bf16[512,128], index: 0, kind: input, shape index: {}]
  %s1 = inlined_call_operand.hbm [shape: bf16[3,128,128], index: 1, kind: input, shape index: {}]
  %s2 = inlined_call_operand.hbm [shape: f32[3,128], index: 2, kind: input, shape index: {}]
  %s3 = inlined_call_operand.hbm [shape: f32[512,128], index: 3, kind: output, shape index: {}]
  %s4 = sld [smem:[#allocation0]]
  $region57: #{tpu_custom_call.1} parent=0
    _
  %s6 = ssub.s32 1, %s4
  %s7 = scalar_select 0, %s6, %s4
  $region1: #{tpu_custom_call.1} parent=0
    #allocation2 [shape = 'u8[131072]{0}', space=vmem, size = 0x20000, scoped, tag = 'input window, operand 0']
    #allocation3 [shape = 's32[2]{0}', space=sflag, size = 0x8, scoped, tag = 'scoped memory for tpu_custom_call.1']
    #allocation4 [shape = 's32[2]{0}', space=sflag, size = 0x8, scoped, tag = 'scoped memory for tpu_custom_call.1']
    #allocation5 [shape = 'u8[98304]{0}', space=vmem, size = 0x18000, scoped, tag = 'input window, operand 1, single buffered']
    #allocation6 [shape = 's32[1]{0}', space=sflag, size = 0x4, scoped, tag = 'scoped memory for tpu_custom_call.1']
    #allocation7 [shape = 'u8[2048]{0}', space=vmem, size = 0x800, scoped, tag = 'input window, operand 2, single buffered']
    #allocation8 [shape = 'u8[262144]{0}', space=vmem, size = 0x40000, scoped, tag = 'output window, operand 0']
    %8 = vsyncpa [#allocation3], 0
    %s9 = scalar_lea.sflag [#allocation3], 1
    %10 = vsyncpa %s9, 0
    %11 = vsyncpa [#allocation6], 0
    %12 = vsyncpa [#allocation4], 0
    %s13 = scalar_lea.sflag [#allocation4], 1
    %14 = vsyncpa %s13, 0
    loop: start=0, step=1, limit=4
    $region2: #{tpu_custom_call.1} parent=1 // loop_pre_header
      _
    $region3: #{tpu_custom_call.1} parent=1 // loop_header
      %s16 = sphi 0, %s20
      %p17 = scmp.ge.s32.totalorder %s16, 4
      %s26 = sphi 0, %s28
      %s29 = sphi 0, %s26
      %s30 = sphi 0, %s29
      %s46 = sphi 0, %s30
      %s50 = sphi 0, %s50
      %s52 = sphi 0, %s50
      %s53 = sphi 0, %s52
      %s67 = sphi 0, %s53
      %s71 = sphi 0, %s71
      %s73 = sphi 0, %s71
      %s74 = sphi 0, %s73
      %s88 = sphi 0, %s74
      %s94 = sphi 0, %s96
      %s97 = sphi 0, %s94
      %s98 = sphi 0, %s97
      %s114 = sphi 0, %s98
    $region4: #{tpu_custom_call.1} parent=1 // loop_header_branch
      %19 = sbr.rel (%p17) target = $region8
    $region5: #{tpu_custom_call.1} parent=1 // loop_body
      %s21 = ssub.s32 %s16, 1
      %s22 = ssub.s32 %s16, 2
      %s23 = sadd.s32 %s16, 1
      %s24 = ssub.s32 %s16, %s23
      %p25 = scmp.eq.s32.totalorder %s24, 0
      %s27 = sadd.s32 %s26, 1
      %s28 = scalar_select %p25, %s26, %s27
      %p31 = pneg %p25
      %p32 = scmp.eq.s32.totalorder %s16, 1
      %p33 = por %p31, %p32
      %p34 = scmp.ne.s32.totalorder %s26, %s29
      %p35 = scmp.eq.s32.totalorder %s16, 0
      %p36 = por %p34, %p35
      %p37 = scmp.ne.s32.totalorder %s26, %s29
      %p38 = scmp.eq.s32.totalorder %s21, 1
      %p39 = por %p37, %p38
      %p40 = scmp.ne.s32.totalorder %s29, %s30
      %p41 = scmp.eq.s32.totalorder %s21, 0
      %p42 = por %p40, %p41
      %p43 = scmp.ne.s32.totalorder %s29, %s30
      %p44 = scmp.eq.s32.totalorder %s22, 1
      %p45 = por %p43, %p44
      %p47 = scmp.ne.s32.totalorder %s30, %s46
      %p48 = scmp.eq.s32.totalorder %s22, 0
      %p49 = por %p47, %p48
      %s51 = sadd.s32 %s50, 1
      %p54 = scmp.eq.s32.totalorder %s16, 1
      %p55 = scmp.ne.s32.totalorder %s50, %s52
      %p56 = scmp.eq.s32.totalorder %s16, 0
      %p57 = por %p55, %p56
      %p58 = scmp.ne.s32.totalorder %s50, %s52
      %p59 = scmp.eq.s32.totalorder %s21, 1
      %p60 = por %p58, %p59
      %p61 = scmp.ne.s32.totalorder %s52, %s53
      %p62 = scmp.eq.s32.totalorder %s21, 0
      %p63 = por %p61, %p62
      %p64 = scmp.ne.s32.totalorder %s52, %s53
      %p65 = scmp.eq.s32.totalorder %s22, 1
      %p66 = por %p64, %p65
      %p68 = scmp.ne.s32.totalorder %s53, %s67
      %p69 = scmp.eq.s32.totalorder %s22, 0
      %p70 = por %p68, %p69
      %s72 = sadd.s32 %s71, 1
      %p75 = scmp.eq.s32.totalorder %s16, 1
      %p76 = scmp.ne.s32.totalorder %s71, %s73
      %p77 = scmp.eq.s32.totalorder %s16, 0
      %p78 = por %p76, %p77
      %p79 = scmp.ne.s32.totalorder %s71, %s73
      %p80 = scmp.eq.s32.totalorder %s21, 1
      %p81 = por %p79, %p80
      %p82 = scmp.ne.s32.totalorder %s73, %s74
      %p83 = scmp.eq.s32.totalorder %s21, 0
      %p84 = por %p82, %p83
      %p85 = scmp.ne.s32.totalorder %s73, %s74
      %p86 = scmp.eq.s32.totalorder %s22, 1
      %p87 = por %p85, %p86
      %p89 = scmp.ne.s32.totalorder %s74, %s88
      %p90 = scmp.eq.s32.totalorder %s22, 0
      %p91 = por %p89, %p90
      %s92 = ssub.s32 %s16, %s23
      %p93 = scmp.eq.s32.totalorder %s92, 0
      %s95 = sadd.s32 %s94, 1
      %s96 = scalar_select %p93, %s94, %s95
      %p99 = pneg %p93
      %p100 = scmp.eq.s32.totalorder %s16, 1
      %p101 = por %p99, %p100
      %p102 = scmp.ne.s32.totalorder %s94, %s97
      %p103 = scmp.eq.s32.totalorder %s16, 0
      %p104 = por %p102, %p103
      %p105 = scmp.ne.s32.totalorder %s94, %s97
      %p106 = scmp.eq.s32.totalorder %s21, 1
      %p107 = por %p105, %p106
      %p108 = scmp.ne.s32.totalorder %s97, %s98
      %p109 = scmp.eq.s32.totalorder %s21, 0
      %p110 = por %p108, %p109
      %p111 = scmp.ne.s32.totalorder %s97, %s98
      %p112 = scmp.eq.s32.totalorder %s22, 1
      %p113 = por %p111, %p112
      %p115 = scmp.ne.s32.totalorder %s98, %s114
      %p116 = scmp.eq.s32.totalorder %s22, 0
      %p117 = por %p115, %p116
      %p118 = scmp.le.s32.totalorder 1, %s16
      %p119 = scmp.lt.s32.totalorder %s16, 3
      %p120 = pnand %p118, %p119
      %p121 = pneg %p120
      // Predicated region
      $region9: #{tpu_custom_call.1} parent=5 // pred_check
        _
      $region10: #{tpu_custom_call.1} parent=5 // pred_check_branch
        %123 = sbr.rel (%p120) target = $region12
      $region11: #{tpu_custom_call.1} parent=5 // pred_region
        %s124 = ssub.s32 %s16, 1
        // Predicated region
        $region13: #{tpu_custom_call.1} parent=11 // pred_check
          %p125 = pneg %p63
        $region14: #{tpu_custom_call.1} parent=11 // pred_check_branch
          %127 = sbr.rel (%p125) target = $region16
        $region15: #{tpu_custom_call.1} parent=11 // pred_region
          %129 = vsyncadd [#allocation6], 0
          %s130 = sshll.u32 %s1, 4
          %s131 = int_to_ptr.hbm [resolvable:$true] %s130
          %s132 = sshll.u32 [#allocation5], 4
          %s133 = int_to_ptr.vmem [resolvable:$true] %s132
          %138 = dma.hbm_to_vmem [thread:$0]  %s131, 3072, %s133, [#allocation6], 64, 64, 4
        $region16: #{tpu_custom_call.1} parent=11 // pred_fallthru
          _
        // Predicated region
        $region17: #{tpu_custom_call.1} parent=11 // pred_check
          %p139 = pneg %p84
        $region18: #{tpu_custom_call.1} parent=11 // pred_check_branch
          %141 = sbr.rel (%p139) target = $region20
        $region19: #{tpu_custom_call.1} parent=11 // pred_region
          %143 = vsyncadd [#allocation6], 0
          %s145 = sshll.u32 %s2, 4
          %s146 = int_to_ptr.hbm [resolvable:$true] %s145
          %s147 = sshll.u32 [#allocation7], 4
          %s148 = int_to_ptr.vmem [resolvable:$true] %s147
          %150 = dma.hbm_to_vmem [thread:$0]  %s146, 64, %s148, [#allocation6]
        $region20: #{tpu_custom_call.1} parent=11 // pred_fallthru
          _
      $region12: #{tpu_custom_call.1} parent=5 // pred_fallthru
        _
      %p151 = scmp.lt.s32.totalorder %s16, 2
      // Predicated region
      $region21: #{tpu_custom_call.1} parent=5 // pred_check
        %p152 = pneg %p151
      $region22: #{tpu_custom_call.1} parent=5 // pred_check_branch
        %154 = sbr.rel (%p152) target = $region24
      $region23: #{tpu_custom_call.1} parent=5 // pred_region
        // Predicated region
        $region25: #{tpu_custom_call.1} parent=23 // pred_check
          %p155 = pneg %p36
        $region26: #{tpu_custom_call.1} parent=23 // pred_check_branch
          %157 = sbr.rel (%p155) target = $region28
        $region27: #{tpu_custom_call.1} parent=23 // pred_region
          %s158 = sand.u32 %s26, 1
          %s159 = scalar_lea.sflag [#allocation3], %s158
          %s160 = sand.u32 %s26, 1
          %s161 = smul.addr %s160, 128
          %s162 = scalar_lea.vmem [#allocation2], %s161
          %s163 = smul.u32 32, %s16
          %165 = vsyncadd %s159, 0
          %s166 = smul.addr %s163, 4
          %s167 = scalar_lea.hbm %s0, %s166
          %s168 = sshll.u32 %s167, 4
          %s169 = int_to_ptr.hbm [resolvable:$true] %s168
          %s170 = sshll.u32 %s162, 4
          %s171 = int_to_ptr.vmem [resolvable:$true] %s170
          %176 = dma.hbm_to_vmem [thread:$0]  %s169, 2048, %s171, %s159, 64, 64, 4
        $region28: #{tpu_custom_call.1} parent=23 // pred_fallthru
          _
      $region24: #{tpu_custom_call.1} parent=5 // pred_fallthru
        _
      %p177 = scmp.le.s32.totalorder 1, %s16
      %p178 = scmp.lt.s32.totalorder %s16, 3
      %p179 = pnand %p177, %p178
      %p180 = pneg %p179
      // Predicated region
      $region29: #{tpu_custom_call.1} parent=5 // pred_check
        _
      $region30: #{tpu_custom_call.1} parent=5 // pred_check_branch
        %182 = sbr.rel (%p179) target = $region32
      $region31: #{tpu_custom_call.1} parent=5 // pred_region
        %s183 = ssub.s32 %s16, 1
        %s184 = sand.u32 %s29, 1
        %s185 = scalar_lea.sflag [#allocation3], %s184
        %s186 = sand.u32 %s29, 1
        %s187 = smul.addr %s186, 128
        %s188 = scalar_lea.vmem [#allocation2], %s187
        // Predicated region
        $region33: #{tpu_custom_call.1} parent=31 // pred_check
          %p189 = pneg %p42
        $region34: #{tpu_custom_call.1} parent=31 // pred_check_branch
          %191 = sbr.rel (%p189) target = $region36
        $region35: #{tpu_custom_call.1} parent=31 // pred_region
          %193 = dma.done %s185, 2048
        $region36: #{tpu_custom_call.1} parent=31 // pred_fallthru
          _
        // Predicated region
        $region37: #{tpu_custom_call.1} parent=31 // pred_check
          %p194 = pneg %p63
        $region38: #{tpu_custom_call.1} parent=31 // pred_check_branch
          %196 = sbr.rel (%p194) target = $region40
        $region39: #{tpu_custom_call.1} parent=31 // pred_region
          %198 = dma.done [#allocation6], 3072
        $region40: #{tpu_custom_call.1} parent=31 // pred_fallthru
          _
        // Predicated region
        $region41: #{tpu_custom_call.1} parent=31 // pred_check
          %p199 = pneg %p84
        $region42: #{tpu_custom_call.1} parent=31 // pred_check_branch
          %201 = sbr.rel (%p199) target = $region44
        $region43: #{tpu_custom_call.1} parent=31 // pred_region
          %203 = dma.done [#allocation6], 64
        $region44: #{tpu_custom_call.1} parent=31 // pred_fallthru
          _
        %s204 = sand.u32 %s29, 1
        %s205 = scalar_lea.sflag [#allocation3], %s204
        %s206 = sand.u32 %s29, 1
        %s207 = smul.addr %s206, 128
        %s208 = scalar_lea.vmem [#allocation2], %s207
        %p209 = pneg %p42
        %p210 = pneg %p39
        %p211 = pneg %p63
        %p212 = pneg %p60
        %p213 = pneg %p84
        %p214 = pneg %p81
        %p215 = pneg %p110
        %p216 = pneg %p107
        %s217 = sand.u32 %s97, 1
        %s218 = scalar_lea.sflag [#allocation4], %s217
        %s219 = sand.u32 %s97, 1
        %s220 = smul.addr %s219, 256
        %s221 = scalar_lea.vmem [#allocation8], %s220
        %s222 = smul.u32 32, %s21
        %s223 = smul.u32 32, %s21
        %v224 = vld [vmem:[%s188] sm:$0xf]
        %v225 = vld [vmem:[%s188 + $0x4] sm:$0xf]
        %v226 = vld [vmem:[%s188 + $0x8] sm:$0xf]
        %v227 = vld [vmem:[%s188 + $0xc] sm:$0xf]
        %v228 = vld [vmem:[%s188 + $0x10] sm:$0xf]
        %v229 = vld [vmem:[%s188 + $0x14] sm:$0xf]
        %v230 = vld [vmem:[%s188 + $0x18] sm:$0xf]
        %v231 = vld [vmem:[%s188 + $0x1c] sm:$0xf]
        %v232 = vld [vmem:[%s188 + $0x20] sm:$0xf]
        %v233 = vld [vmem:[%s188 + $0x24] sm:$0xf]
        %v234 = vld [vmem:[%s188 + $0x28] sm:$0xf]
        %v235 = vld [vmem:[%s188 + $0x2c] sm:$0xf]
        %v236 = vld [vmem:[%s188 + $0x30] sm:$0xf]
        %v237 = vld [vmem:[%s188 + $0x34] sm:$0xf]
        %v238 = vld [vmem:[%s188 + $0x38] sm:$0xf]
        %v239 = vld [vmem:[%s188 + $0x3c] sm:$0xf]
        %v240 = vld [vmem:[%s188 + $0x40] sm:$0xf]
        %v241 = vld [vmem:[%s188 + $0x44] sm:$0xf]
        %v242 = vld [vmem:[%s188 + $0x48] sm:$0xf]
        %v243 = vld [vmem:[%s188 + $0x4c] sm:$0xf]
        %v244 = vld [vmem:[%s188 + $0x50] sm:$0xf]
        %v245 = vld [vmem:[%s188 + $0x54] sm:$0xf]
        %v246 = vld [vmem:[%s188 + $0x58] sm:$0xf]
        %v247 = vld [vmem:[%s188 + $0x5c] sm:$0xf]
        %v248 = vld [vmem:[%s188 + $0x60] sm:$0xf]
        %v249 = vld [vmem:[%s188 + $0x64] sm:$0xf]
        %v250 = vld [vmem:[%s188 + $0x68] sm:$0xf]
        %v251 = vld [vmem:[%s188 + $0x6c] sm:$0xf]
        %v252 = vld [vmem:[%s188 + $0x70] sm:$0xf]
        %v253 = vld [vmem:[%s188 + $0x74] sm:$0xf]
        %v254 = vld [vmem:[%s188 + $0x78] sm:$0xf]
        %v255 = vld [vmem:[%s188 + $0x7c] sm:$0xf]
        %v256 = vld [vmem:[#allocation5] sm:$0xf]
        %v257 = vld [vmem:[#allocation5 + $0x4] sm:$0xf]
        %v258 = vld [vmem:[#allocation5 + $0x8] sm:$0xf]
        %v259 = vld [vmem:[#allocation5 + $0xc] sm:$0xf]
        %v260 = vld [vmem:[#allocation5 + $0x10] sm:$0xf]
        %v261 = vld [vmem:[#allocation5 + $0x14] sm:$0xf]
        %v262 = vld [vmem:[#allocation5 + $0x18] sm:$0xf]
        %v263 = vld [vmem:[#allocation5 + $0x1c] sm:$0xf]
        %v264 = vld [vmem:[#allocation5 + $0x20] sm:$0xf]
        %v265 = vld [vmem:[#allocation5 + $0x24] sm:$0xf]
        %v266 = vld [vmem:[#allocation5 + $0x28] sm:$0xf]
        %v267 = vld [vmem:[#allocation5 + $0x2c] sm:$0xf]
        %v268 = vld [vmem:[#allocation5 + $0x30] sm:$0xf]
        %v269 = vld [vmem:[#allocation5 + $0x34] sm:$0xf]
        %v270 = vld [vmem:[#allocation5 + $0x38] sm:$0xf]
        %v271 = vld [vmem:[#allocation5 + $0x3c] sm:$0xf]
        %v272 = vld [vmem:[#allocation7] sm:$0x1]
        %v273 = vperm.slane %v272, 0
        %v306 = vunpack.c.l.b16 %v224
        %v307 = vunpack.c.l.b16 %v225
        %v308 = vunpack.c.l.b16 %v226
        %v309 = vunpack.c.l.b16 %v227
        %v310 = vunpack.c.l.b16 %v228
        %v311 = vunpack.c.l.b16 %v229
        %v312 = vunpack.c.l.b16 %v230
        %v313 = vunpack.c.l.b16 %v231
        %v314 = vunpack.c.l.b16 %v232
        %v315 = vunpack.c.l.b16 %v233
        %v316 = vunpack.c.l.b16 %v234
        %v317 = vunpack.c.l.b16 %v235
        %v318 = vunpack.c.l.b16 %v236
        %v319 = vunpack.c.l.b16 %v237
        %v320 = vunpack.c.l.b16 %v238
        %v321 = vunpack.c.l.b16 %v239
        %v322 = vunpack.c.l.b16 %v240
        %v323 = vunpack.c.l.b16 %v241
        %v324 = vunpack.c.l.b16 %v242
        %v325 = vunpack.c.l.b16 %v243
        %v326 = vunpack.c.l.b16 %v244
        %v327 = vunpack.c.l.b16 %v245
        %v328 = vunpack.c.l.b16 %v246
        %v329 = vunpack.c.l.b16 %v247
        %v330 = vunpack.c.l.b16 %v248
        %v331 = vunpack.c.l.b16 %v249
        %v332 = vunpack.c.l.b16 %v250
        %v333 = vunpack.c.l.b16 %v251
        %v334 = vunpack.c.l.b16 %v252
        %v335 = vunpack.c.l.b16 %v253
        %v336 = vunpack.c.l.b16 %v254
        %v337 = vunpack.c.l.b16 %v255
        %v338 = vpack.c.b16 %v307, %v306
        %v339 = vpack.c.b16 %v309, %v308
        %v340 = vpack.c.b16 %v311, %v310
        %v341 = vpack.c.b16 %v313, %v312
        %v342 = vpack.c.b16 %v315, %v314
        %v343 = vpack.c.b16 %v317, %v316
        %v344 = vpack.c.b16 %v319, %v318
        %v345 = vpack.c.b16 %v321, %v320
        %v346 = vpack.c.b16 %v323, %v322
        %v347 = vpack.c.b16 %v325, %v324
        %v348 = vpack.c.b16 %v327, %v326
        %v349 = vpack.c.b16 %v329, %v328
        %v350 = vpack.c.b16 %v331, %v330
        %v351 = vpack.c.b16 %v333, %v332
        %v352 = vpack.c.b16 %v335, %v334
        %v353 = vpack.c.b16 %v337, %v336
        %v386 = vunpack.c.l.b16 %v256
        %v387 = vunpack.c.l.b16 %v257
        %v388 = vunpack.c.l.b16 %v258
        %v389 = vunpack.c.l.b16 %v259
        %v390 = vunpack.c.l.b16 %v260
        %v391 = vunpack.c.l.b16 %v261
        %v392 = vunpack.c.l.b16 %v262
        %v393 = vunpack.c.l.b16 %v263
        %v394 = vunpack.c.l.b16 %v264
        %v395 = vunpack.c.l.b16 %v265
        %v396 = vunpack.c.l.b16 %v266
        %v397 = vunpack.c.l.b16 %v267
        %v398 = vunpack.c.l.b16 %v268
        %v399 = vunpack.c.l.b16 %v269
        %v400 = vunpack.c.l.b16 %v270
        %v401 = vunpack.c.l.b16 %v271
        %v402 = vpack.c.b16 %v387, %v386
        %v403 = vpack.c.b16 %v389, %v388
        %v404 = vpack.c.b16 %v391, %v390
        %v405 = vpack.c.b16 %v393, %v392
        %v406 = vpack.c.b16 %v395, %v394
        %v407 = vpack.c.b16 %v397, %v396
        %v408 = vpack.c.b16 %v399, %v398
        %v409 = vpack.c.b16 %v401, %v400
        %418 = vmatpush.bf16.msra.mxu0 %v409
        %419 = vmatpush.bf16.msra.mxu0 %v408
        %420 = vmatpush.bf16.msra.mxu0 %v407
        %421 = vmatpush.bf16.msra.mxu0 %v406
        %422 = vmatpush.bf16.msra.mxu0 %v405
        %423 = vmatpush.bf16.msra.mxu0 %v404
        %424 = vmatpush.bf16.msra.mxu0 %v403
        %425 = vmatpush.bf16.msra.mxu0 %v402
        %426 = vmatmul.bf16.gmra.mxu0 %v338
        %v427 = vpop.f32.mrf.mxu0
        %v428 = vadd.f32 %v273, %v427
        %v429 = vpop.f32.mrf.mxu0
        %v430 = vadd.f32 %v273, %v429
        %431 = vmatmul.bf16.gmra.mxu0 %v339
        %v432 = vpop.f32.mrf.mxu0
        %v433 = vadd.f32 %v273, %v432
        %v434 = vpop.f32.mrf.mxu0
        %v435 = vadd.f32 %v273, %v434
        %436 = vmatmul.bf16.gmra.mxu0 %v340
        %v437 = vpop.f32.mrf.mxu0
        %v438 = vadd.f32 %v273, %v437
        %v439 = vpop.f32.mrf.mxu0
        %v440 = vadd.f32 %v273, %v439
        %441 = vmatmul.bf16.gmra.mxu0 %v341
        %v442 = vpop.f32.mrf.mxu0
        %v443 = vadd.f32 %v273, %v442
        %v444 = vpop.f32.mrf.mxu0
        %v445 = vadd.f32 %v273, %v444
        %446 = vmatmul.bf16.gmra.mxu0 %v342
        %v447 = vpop.f32.mrf.mxu0
        %v448 = vadd.f32 %v273, %v447
        %v449 = vpop.f32.mrf.mxu0
        %v450 = vadd.f32 %v273, %v449
        %451 = vmatmul.bf16.gmra.mxu0 %v343
        %v452 = vpop.f32.mrf.mxu0
        %v453 = vadd.f32 %v273, %v452
        %v454 = vpop.f32.mrf.mxu0
        %v455 = vadd.f32 %v273, %v454
        %456 = vmatmul.bf16.gmra.mxu0 %v344
        %v457 = vpop.f32.mrf.mxu0
        %v458 = vadd.f32 %v273, %v457
        %v459 = vpop.f32.mrf.mxu0
        %v460 = vadd.f32 %v273, %v459
        %461 = vmatmul.bf16.gmra.mxu0 %v345
        %v462 = vpop.f32.mrf.mxu0
        %v463 = vadd.f32 %v273, %v462
        %v464 = vpop.f32.mrf.mxu0
        %v465 = vadd.f32 %v273, %v464
        %466 = vmatmul.bf16.gmra.mxu0 %v346
        %v467 = vpop.f32.mrf.mxu0
        %v468 = vadd.f32 %v273, %v467
        %v469 = vpop.f32.mrf.mxu0
        %v470 = vadd.f32 %v273, %v469
        %471 = vmatmul.bf16.gmra.mxu0 %v347
        %v472 = vpop.f32.mrf.mxu0
        %v473 = vadd.f32 %v273, %v472
        %v474 = vpop.f32.mrf.mxu0
        %v475 = vadd.f32 %v273, %v474
        %476 = vmatmul.bf16.gmra.mxu0 %v348
        %v477 = vpop.f32.mrf.mxu0
        %v478 = vadd.f32 %v273, %v477
        %v479 = vpop.f32.mrf.mxu0
        %v480 = vadd.f32 %v273, %v479
        %481 = vmatmul.bf16.gmra.mxu0 %v349
        %v482 = vpop.f32.mrf.mxu0
        %v483 = vadd.f32 %v273, %v482
        %v484 = vpop.f32.mrf.mxu0
        %v485 = vadd.f32 %v273, %v484
        %486 = vmatmul.bf16.gmra.mxu0 %v350
        %v487 = vpop.f32.mrf.mxu0
        %v488 = vadd.f32 %v273, %v487
        %v489 = vpop.f32.mrf.mxu0
        %v490 = vadd.f32 %v273, %v489
        %491 = vmatmul.bf16.gmra.mxu0 %v351
        %v492 = vpop.f32.mrf.mxu0
        %v493 = vadd.f32 %v273, %v492
        %v494 = vpop.f32.mrf.mxu0
        %v495 = vadd.f32 %v273, %v494
        %496 = vmatmul.bf16.gmra.mxu0 %v352
        %v497 = vpop.f32.mrf.mxu0
        %v498 = vadd.f32 %v273, %v497
        %v499 = vpop.f32.mrf.mxu0
        %v500 = vadd.f32 %v273, %v499
        %501 = vmatmul.bf16.gmra.mxu0 %v353
        %v502 = vpop.f32.mrf.mxu0
        %v503 = vadd.f32 %v273, %v502
        %v504 = vpop.f32.mrf.mxu0
        %v505 = vadd.f32 %v273, %v504
        %506 = vdwg.mxu0
        %v507 = vmul.f32 %v428, 0.3
        %v508 = vmul.f32 %v430, 0.3
        %v509 = vmul.f32 %v433, 0.3
        %v510 = vmul.f32 %v435, 0.3
        %v511 = vmul.f32 %v438, 0.3
        %v512 = vmul.f32 %v440, 0.3
        %v513 = vmul.f32 %v443, 0.3
        %v514 = vmul.f32 %v445, 0.3
        %v515 = vmul.f32 %v448, 0.3
        %v516 = vmul.f32 %v450, 0.3
        %v517 = vmul.f32 %v453, 0.3
        %v518 = vmul.f32 %v455, 0.3
        %v519 = vmul.f32 %v458, 0.3
        %v520 = vmul.f32 %v460, 0.3
        %v521 = vmul.f32 %v463, 0.3
        %v522 = vmul.f32 %v465, 0.3
        %v523 = vmul.f32 %v468, 0.3
        %v524 = vmul.f32 %v470, 0.3
        %v525 = vmul.f32 %v473, 0.3
        %v526 = vmul.f32 %v475, 0.3
        %v527 = vmul.f32 %v478, 0.3
        %v528 = vmul.f32 %v480, 0.3
        %v529 = vmul.f32 %v483, 0.3
        %v530 = vmul.f32 %v485, 0.3
        %v531 = vmul.f32 %v488, 0.3
        %v532 = vmul.f32 %v490, 0.3
        %v533 = vmul.f32 %v493, 0.3
        %v534 = vmul.f32 %v495, 0.3
        %v535 = vmul.f32 %v498, 0.3
        %v536 = vmul.f32 %v500, 0.3
        %v537 = vmul.f32 %v503, 0.3
        %v538 = vmul.f32 %v505, 0.3
        %v539 = vmul.f32 %v507, 1.442695
        %v540 = vpow.pop %v539
        %v541 = vmul.f32 %v508, 1.442695
        %v542 = vpow.pop %v541
        %v543 = vmul.f32 %v509, 1.442695
        %v544 = vpow.pop %v543
        %v545 = vmul.f32 %v510, 1.442695
        %v546 = vpow.pop %v545
        %v547 = vmul.f32 %v511, 1.442695
        %v548 = vpow.pop %v547
        %v549 = vmul.f32 %v512, 1.442695
        %v550 = vpow.pop %v549
        %v551 = vmul.f32 %v513, 1.442695
        %v552 = vpow.pop %v551
        %v553 = vmul.f32 %v514, 1.442695
        %v554 = vpow.pop %v553
        %v555 = vmul.f32 %v515, 1.442695
        %v556 = vpow.pop %v555
        %v557 = vmul.f32 %v516, 1.442695
        %v558 = vpow.pop %v557
        %v559 = vmul.f32 %v517, 1.442695
        %v560 = vpow.pop %v559
        %v561 = vmul.f32 %v518, 1.442695
        %v562 = vpow.pop %v561
        %v563 = vmul.f32 %v519, 1.442695
        %v564 = vpow.pop %v563
        %v565 = vmul.f32 %v520, 1.442695
        %v566 = vpow.pop %v565
        %v567 = vmul.f32 %v521, 1.442695
        %v568 = vpow.pop %v567
        %v569 = vmul.f32 %v522, 1.442695
        %v570 = vpow.pop %v569
        %v571 = vmul.f32 %v523, 1.442695
        %v572 = vpow.pop %v571
        %v573 = vmul.f32 %v524, 1.442695
        %v574 = vpow.pop %v573
        %v575 = vmul.f32 %v525, 1.442695
        %v576 = vpow.pop %v575
        %v577 = vmul.f32 %v526, 1.442695
        %v578 = vpow.pop %v577
        %v579 = vmul.f32 %v527, 1.442695
        %v580 = vpow.pop %v579
        %v581 = vmul.f32 %v528, 1.442695
        %v582 = vpow.pop %v581
        %v583 = vmul.f32 %v529, 1.442695
        %v584 = vpow.pop %v583
        %v585 = vmul.f32 %v530, 1.442695
        %v586 = vpow.pop %v585
        %v587 = vmul.f32 %v531, 1.442695
        %v588 = vpow.pop %v587
        %v589 = vmul.f32 %v532, 1.442695
        %v590 = vpow.pop %v589
        %v591 = vmul.f32 %v533, 1.442695
        %v592 = vpow.pop %v591
        %v593 = vmul.f32 %v534, 1.442695
        %v594 = vpow.pop %v593
        %v595 = vmul.f32 %v535, 1.442695
        %v596 = vpow.pop %v595
        %v597 = vmul.f32 %v536, 1.442695
        %v598 = vpow.pop %v597
        %v599 = vmul.f32 %v537, 1.442695
        %v600 = vpow.pop %v599
        %v601 = vmul.f32 %v538, 1.442695
        %v602 = vpow.pop %v601
        %v603 = vsub.f32 %v540, 1.0
        %v604 = vsub.f32 %v542, 1.0
        %v605 = vsub.f32 %v544, 1.0
        %v606 = vsub.f32 %v546, 1.0
        %v607 = vsub.f32 %v548, 1.0
        %v608 = vsub.f32 %v550, 1.0
        %v609 = vsub.f32 %v552, 1.0
        %v610 = vsub.f32 %v554, 1.0
        %v611 = vsub.f32 %v556, 1.0
        %v612 = vsub.f32 %v558, 1.0
        %v613 = vsub.f32 %v560, 1.0
        %v614 = vsub.f32 %v562, 1.0
        %v615 = vsub.f32 %v564, 1.0
        %v616 = vsub.f32 %v566, 1.0
        %v617 = vsub.f32 %v568, 1.0
        %v618 = vsub.f32 %v570, 1.0
        %v619 = vsub.f32 %v572, 1.0
        %v620 = vsub.f32 %v574, 1.0
        %v621 = vsub.f32 %v576, 1.0
        %v622 = vsub.f32 %v578, 1.0
        %v623 = vsub.f32 %v580, 1.0
        %v624 = vsub.f32 %v582, 1.0
        %v625 = vsub.f32 %v584, 1.0
        %v626 = vsub.f32 %v586, 1.0
        %v627 = vsub.f32 %v588, 1.0
        %v628 = vsub.f32 %v590, 1.0
        %v629 = vsub.f32 %v592, 1.0
        %v630 = vsub.f32 %v594, 1.0
        %v631 = vsub.f32 %v596, 1.0
        %v632 = vsub.f32 %v598, 1.0
        %v633 = vsub.f32 %v600, 1.0
        %v634 = vsub.f32 %v602, 1.0
        %v635 = vrcp.pop 0.3
        %v636 = vmul.f32 0.3, %v635
        %v637 = vsub.f32 1.0, %v636
        %v638 = vmul.f32 %v635, %v637
        %v639 = vadd.f32 %v635, %v638
        %vm640 = vweird.f32 %v635
        %v641 = vsel %vm640, %v635, %v639
        %v642 = vmul.f32 %v603, %v641
        %v643 = vmul.f32 %v604, %v641
        %v644 = vmul.f32 %v605, %v641
        %v645 = vmul.f32 %v606, %v641
        %v646 = vmul.f32 %v607, %v641
        %v647 = vmul.f32 %v608, %v641
        %v648 = vmul.f32 %v609, %v641
        %v649 = vmul.f32 %v610, %v641
        %v650 = vmul.f32 %v611, %v641
        %v651 = vmul.f32 %v612, %v641
        %v652 = vmul.f32 %v613, %v641
        %v653 = vmul.f32 %v614, %v641
        %v654 = vmul.f32 %v615, %v641
        %v655 = vmul.f32 %v616, %v641
        %v656 = vmul.f32 %v617, %v641
        %v657 = vmul.f32 %v618, %v641
        %v658 = vmul.f32 %v619, %v641
        %v659 = vmul.f32 %v620, %v641
        %v660 = vmul.f32 %v621, %v641
        %v661 = vmul.f32 %v622, %v641
        %v662 = vmul.f32 %v623, %v641
        %v663 = vmul.f32 %v624, %v641
        %v664 = vmul.f32 %v625, %v641
        %v665 = vmul.f32 %v626, %v641
        %v666 = vmul.f32 %v627, %v641
        %v667 = vmul.f32 %v628, %v641
        %v668 = vmul.f32 %v629, %v641
        %v669 = vmul.f32 %v630, %v641
        %v670 = vmul.f32 %v631, %v641
        %v671 = vmul.f32 %v632, %v641
        %v672 = vmul.f32 %v633, %v641
        %v673 = vmul.f32 %v634, %v641
        %v674 = vadd.f32 %v642, 0.3
        %v675 = vadd.f32 %v643, 0.3
        %v676 = vadd.f32 %v644, 0.3
        %v677 = vadd.f32 %v645, 0.3
        %v678 = vadd.f32 %v646, 0.3
        %v679 = vadd.f32 %v647, 0.3
        %v680 = vadd.f32 %v648, 0.3
        %v681 = vadd.f32 %v649, 0.3
        %v682 = vadd.f32 %v650, 0.3
        %v683 = vadd.f32 %v651, 0.3
        %v684 = vadd.f32 %v652, 0.3
        %v685 = vadd.f32 %v653, 0.3
        %v686 = vadd.f32 %v654, 0.3
        %v687 = vadd.f32 %v655, 0.3
        %v688 = vadd.f32 %v656, 0.3
        %v689 = vadd.f32 %v657, 0.3
        %v690 = vadd.f32 %v658, 0.3
        %v691 = vadd.f32 %v659, 0.3
        %v692 = vadd.f32 %v660, 0.3
        %v693 = vadd.f32 %v661, 0.3
        %v694 = vadd.f32 %v662, 0.3
        %v695 = vadd.f32 %v663, 0.3
        %v696 = vadd.f32 %v664, 0.3
        %v697 = vadd.f32 %v665, 0.3
        %v698 = vadd.f32 %v666, 0.3
        %v699 = vadd.f32 %v667, 0.3
        %v700 = vadd.f32 %v668, 0.3
        %v701 = vadd.f32 %v669, 0.3
        %v702 = vadd.f32 %v670, 0.3
        %v703 = vadd.f32 %v671, 0.3
        %v704 = vadd.f32 %v672, 0.3
        %v705 = vadd.f32 %v673, 0.3
        %v706 = vpack.c.bf16 %v675, %v674
        %v707 = vpack.c.bf16 %v677, %v676
        %v708 = vpack.c.bf16 %v679, %v678
        %v709 = vpack.c.bf16 %v681, %v680
        %v710 = vpack.c.bf16 %v683, %v682
        %v711 = vpack.c.bf16 %v685, %v684
        %v712 = vpack.c.bf16 %v687, %v686
        %v713 = vpack.c.bf16 %v689, %v688
        %v714 = vpack.c.bf16 %v691, %v690
        %v715 = vpack.c.bf16 %v693, %v692
        %v716 = vpack.c.bf16 %v695, %v694
        %v717 = vpack.c.bf16 %v697, %v696
        %v718 = vpack.c.bf16 %v699, %v698
        %v719 = vpack.c.bf16 %v701, %v700
        %v720 = vpack.c.bf16 %v703, %v702
        %v721 = vpack.c.bf16 %v705, %v704
        %s722 = scalar_lea.vmem [#allocation5], 64
        %v723 = vld [vmem:[%s722] sm:$0xf]
        %v724 = vld [vmem:[%s722 + $0x4] sm:$0xf]
        %v725 = vld [vmem:[%s722 + $0x8] sm:$0xf]
        %v726 = vld [vmem:[%s722 + $0xc] sm:$0xf]
        %v727 = vld [vmem:[%s722 + $0x10] sm:$0xf]
        %v728 = vld [vmem:[%s722 + $0x14] sm:$0xf]
        %v729 = vld [vmem:[%s722 + $0x18] sm:$0xf]
        %v730 = vld [vmem:[%s722 + $0x1c] sm:$0xf]
        %v731 = vld [vmem:[%s722 + $0x20] sm:$0xf]
        %v732 = vld [vmem:[%s722 + $0x24] sm:$0xf]
        %v733 = vld [vmem:[%s722 + $0x28] sm:$0xf]
        %v734 = vld [vmem:[%s722 + $0x2c] sm:$0xf]
        %v735 = vld [vmem:[%s722 + $0x30] sm:$0xf]
        %v736 = vld [vmem:[%s722 + $0x34] sm:$0xf]
        %v737 = vld [vmem:[%s722 + $0x38] sm:$0xf]
        %v738 = vld [vmem:[%s722 + $0x3c] sm:$0xf]
        %v739 = vld [vmem:[#allocation7 + $0x1] sm:$0x1]
        %v740 = vperm.slane %v739, 0
        %v757 = vunpack.c.l.b16 %v723
        %v758 = vunpack.c.l.b16 %v724
        %v759 = vunpack.c.l.b16 %v725
        %v760 = vunpack.c.l.b16 %v726
        %v761 = vunpack.c.l.b16 %v727
        %v762 = vunpack.c.l.b16 %v728
        %v763 = vunpack.c.l.b16 %v729
        %v764 = vunpack.c.l.b16 %v730
        %v765 = vunpack.c.l.b16 %v731
        %v766 = vunpack.c.l.b16 %v732
        %v767 = vunpack.c.l.b16 %v733
        %v768 = vunpack.c.l.b16 %v734
        %v769 = vunpack.c.l.b16 %v735
        %v770 = vunpack.c.l.b16 %v736
        %v771 = vunpack.c.l.b16 %v737
        %v772 = vunpack.c.l.b16 %v738
        %v773 = vpack.c.b16 %v758, %v757
        %v774 = vpack.c.b16 %v760, %v759
        %v775 = vpack.c.b16 %v762, %v761
        %v776 = vpack.c.b16 %v764, %v763
        %v777 = vpack.c.b16 %v766, %v765
        %v778 = vpack.c.b16 %v768, %v767
        %v779 = vpack.c.b16 %v770, %v769
        %v780 = vpack.c.b16 %v772, %v771
        %789 = vmatpush.bf16.msra.mxu0 %v780
        %790 = vmatpush.bf16.msra.mxu0 %v779
        %791 = vmatpush.bf16.msra.mxu0 %v778
        %792 = vmatpush.bf16.msra.mxu0 %v777
        %793 = vmatpush.bf16.msra.mxu0 %v776
        %794 = vmatpush.bf16.msra.mxu0 %v775
        %795 = vmatpush.bf16.msra.mxu0 %v774
        %796 = vmatpush.bf16.msra.mxu0 %v773
        %797 = vmatmul.bf16.gmra.mxu0 %v706
        %v798 = vpop.f32.mrf.mxu0
        %v799 = vadd.f32 %v740, %v798
        %v800 = vpop.f32.mrf.mxu0
        %v801 = vadd.f32 %v740, %v800
        %802 = vmatmul.bf16.gmra.mxu0 %v707
        %v803 = vpop.f32.mrf.mxu0
        %v804 = vadd.f32 %v740, %v803
        %v805 = vpop.f32.mrf.mxu0
        %v806 = vadd.f32 %v740, %v805
        %807 = vmatmul.bf16.gmra.mxu0 %v708
        %v808 = vpop.f32.mrf.mxu0
        %v809 = vadd.f32 %v740, %v808
        %v810 = vpop.f32.mrf.mxu0
        %v811 = vadd.f32 %v740, %v810
        %812 = vmatmul.bf16.gmra.mxu0 %v709
        %v813 = vpop.f32.mrf.mxu0
        %v814 = vadd.f32 %v740, %v813
        %v815 = vpop.f32.mrf.mxu0
        %v816 = vadd.f32 %v740, %v815
        %817 = vmatmul.bf16.gmra.mxu0 %v710
        %v818 = vpop.f32.mrf.mxu0
        %v819 = vadd.f32 %v740, %v818
        %v820 = vpop.f32.mrf.mxu0
        %v821 = vadd.f32 %v740, %v820
        %822 = vmatmul.bf16.gmra.mxu0 %v711
        %v823 = vpop.f32.mrf.mxu0
        %v824 = vadd.f32 %v740, %v823
        %v825 = vpop.f32.mrf.mxu0
        %v826 = vadd.f32 %v740, %v825
        %827 = vmatmul.bf16.gmra.mxu0 %v712
        %v828 = vpop.f32.mrf.mxu0
        %v829 = vadd.f32 %v740, %v828
        %v830 = vpop.f32.mrf.mxu0
        %v831 = vadd.f32 %v740, %v830
        %832 = vmatmul.bf16.gmra.mxu0 %v713
        %v833 = vpop.f32.mrf.mxu0
        %v834 = vadd.f32 %v740, %v833
        %v835 = vpop.f32.mrf.mxu0
        %v836 = vadd.f32 %v740, %v835
        %837 = vmatmul.bf16.gmra.mxu0 %v714
        %v838 = vpop.f32.mrf.mxu0
        %v839 = vadd.f32 %v740, %v838
        %v840 = vpop.f32.mrf.mxu0
        %v841 = vadd.f32 %v740, %v840
        %842 = vmatmul.bf16.gmra.mxu0 %v715
        %v843 = vpop.f32.mrf.mxu0
        %v844 = vadd.f32 %v740, %v843
        %v845 = vpop.f32.mrf.mxu0
        %v846 = vadd.f32 %v740, %v845
        %847 = vmatmul.bf16.gmra.mxu0 %v716
        %v848 = vpop.f32.mrf.mxu0
        %v849 = vadd.f32 %v740, %v848
        %v850 = vpop.f32.mrf.mxu0
        %v851 = vadd.f32 %v740, %v850
        %852 = vmatmul.bf16.gmra.mxu0 %v717
        %v853 = vpop.f32.mrf.mxu0
        %v854 = vadd.f32 %v740, %v853
        %v855 = vpop.f32.mrf.mxu0
        %v856 = vadd.f32 %v740, %v855
        %857 = vmatmul.bf16.gmra.mxu0 %v718
        %v858 = vpop.f32.mrf.mxu0
        %v859 = vadd.f32 %v740, %v858
        %v860 = vpop.f32.mrf.mxu0
        %v861 = vadd.f32 %v740, %v860
        %862 = vmatmul.bf16.gmra.mxu0 %v719
        %v863 = vpop.f32.mrf.mxu0
        %v864 = vadd.f32 %v740, %v863
        %v865 = vpop.f32.mrf.mxu0
        %v866 = vadd.f32 %v740, %v865
        %867 = vmatmul.bf16.gmra.mxu0 %v720
        %v868 = vpop.f32.mrf.mxu0
        %v869 = vadd.f32 %v740, %v868
        %v870 = vpop.f32.mrf.mxu0
        %v871 = vadd.f32 %v740, %v870
        %872 = vmatmul.bf16.gmra.mxu0 %v721
        %v873 = vpop.f32.mrf.mxu0
        %v874 = vadd.f32 %v740, %v873
        %v875 = vpop.f32.mrf.mxu0
        %v876 = vadd.f32 %v740, %v875
        %877 = vdwg.mxu0
        %v878 = vadd.f32 %v799, -0.25
        %v879 = vadd.f32 %v801, -0.25
        %v880 = vadd.f32 %v804, -0.25
        %v881 = vadd.f32 %v806, -0.25
        %v882 = vadd.f32 %v809, -0.25
        %v883 = vadd.f32 %v811, -0.25
        %v884 = vadd.f32 %v814, -0.25
        %v885 = vadd.f32 %v816, -0.25
        %v886 = vadd.f32 %v819, -0.25
        %v887 = vadd.f32 %v821, -0.25
        %v888 = vadd.f32 %v824, -0.25
        %v889 = vadd.f32 %v826, -0.25
        %v890 = vadd.f32 %v829, -0.25
        %v891 = vadd.f32 %v831, -0.25
        %v892 = vadd.f32 %v834, -0.25
        %v893 = vadd.f32 %v836, -0.25
        %v894 = vadd.f32 %v839, -0.25
        %v895 = vadd.f32 %v841, -0.25
        %v896 = vadd.f32 %v844, -0.25
        %v897 = vadd.f32 %v846, -0.25
        %v898 = vadd.f32 %v849, -0.25
        %v899 = vadd.f32 %v851, -0.25
        %v900 = vadd.f32 %v854, -0.25
        %v901 = vadd.f32 %v856, -0.25
        %v902 = vadd.f32 %v859, -0.25
        %v903 = vadd.f32 %v861, -0.25
        %v904 = vadd.f32 %v864, -0.25
        %v905 = vadd.f32 %v866, -0.25
        %v906 = vadd.f32 %v869, -0.25
        %v907 = vadd.f32 %v871, -0.25
        %v908 = vadd.f32 %v874, -0.25
        %v909 = vadd.f32 %v876, -0.25
        %v910 = vmul.f32 %v878, -0.25
        %v911 = vmul.f32 %v879, -0.25
        %v912 = vmul.f32 %v880, -0.25
        %v913 = vmul.f32 %v881, -0.25
        %v914 = vmul.f32 %v882, -0.25
        %v915 = vmul.f32 %v883, -0.25
        %v916 = vmul.f32 %v884, -0.25
        %v917 = vmul.f32 %v885, -0.25
        %v918 = vmul.f32 %v886, -0.25
        %v919 = vmul.f32 %v887, -0.25
        %v920 = vmul.f32 %v888, -0.25
        %v921 = vmul.f32 %v889, -0.25
        %v922 = vmul.f32 %v890, -0.25
        %v923 = vmul.f32 %v891, -0.25
        %v924 = vmul.f32 %v892, -0.25
        %v925 = vmul.f32 %v893, -0.25
        %v926 = vmul.f32 %v894, -0.25
        %v927 = vmul.f32 %v895, -0.25
        %v928 = vmul.f32 %v896, -0.25
        %v929 = vmul.f32 %v897, -0.25
        %v930 = vmul.f32 %v898, -0.25
        %v931 = vmul.f32 %v899, -0.25
        %v932 = vmul.f32 %v900, -0.25
        %v933 = vmul.f32 %v901, -0.25
        %v934 = vmul.f32 %v902, -0.25
        %v935 = vmul.f32 %v903, -0.25
        %v936 = vmul.f32 %v904, -0.25
        %v937 = vmul.f32 %v905, -0.25
        %v938 = vmul.f32 %v906, -0.25
        %v939 = vmul.f32 %v907, -0.25
        %v940 = vmul.f32 %v908, -0.25
        %v941 = vmul.f32 %v909, -0.25
        %v942 = vsub.f32 1.0, %v910
        %v943 = vsub.f32 1.0, %v911
        %v944 = vsub.f32 1.0, %v912
        %v945 = vsub.f32 1.0, %v913
        %v946 = vsub.f32 1.0, %v914
        %v947 = vsub.f32 1.0, %v915
        %v948 = vsub.f32 1.0, %v916
        %v949 = vsub.f32 1.0, %v917
        %v950 = vsub.f32 1.0, %v918
        %v951 = vsub.f32 1.0, %v919
        %v952 = vsub.f32 1.0, %v920
        %v953 = vsub.f32 1.0, %v921
        %v954 = vsub.f32 1.0, %v922
        %v955 = vsub.f32 1.0, %v923
        %v956 = vsub.f32 1.0, %v924
        %v957 = vsub.f32 1.0, %v925
        %v958 = vsub.f32 1.0, %v926
        %v959 = vsub.f32 1.0, %v927
        %v960 = vsub.f32 1.0, %v928
        %v961 = vsub.f32 1.0, %v929
        %v962 = vsub.f32 1.0, %v930
        %v963 = vsub.f32 1.0, %v931
        %v964 = vsub.f32 1.0, %v932
        %v965 = vsub.f32 1.0, %v933
        %v966 = vsub.f32 1.0, %v934
        %v967 = vsub.f32 1.0, %v935
        %v968 = vsub.f32 1.0, %v936
        %v969 = vsub.f32 1.0, %v937
        %v970 = vsub.f32 1.0, %v938
        %v971 = vsub.f32 1.0, %v939
        %v972 = vsub.f32 1.0, %v940
        %v973 = vsub.f32 1.0, %v941
        %v974 = vlog2.pop %v942
        %v975 = vmul.f32 %v974, 0.6931472
        %v976 = vlog2.pop %v943
        %v977 = vmul.f32 %v976, 0.6931472
        %v978 = vlog2.pop %v944
        %v979 = vmul.f32 %v978, 0.6931472
        %v980 = vlog2.pop %v945
        %v981 = vmul.f32 %v980, 0.6931472
        %v982 = vlog2.pop %v946
        %v983 = vmul.f32 %v982, 0.6931472
        %v984 = vlog2.pop %v947
        %v985 = vmul.f32 %v984, 0.6931472
        %v986 = vlog2.pop %v948
        %v987 = vmul.f32 %v986, 0.6931472
        %v988 = vlog2.pop %v949
        %v989 = vmul.f32 %v988, 0.6931472
        %v990 = vlog2.pop %v950
        %v991 = vmul.f32 %v990, 0.6931472
        %v992 = vlog2.pop %v951
        %v993 = vmul.f32 %v992, 0.6931472
        %v994 = vlog2.pop %v952
        %v995 = vmul.f32 %v994, 0.6931472
        %v996 = vlog2.pop %v953
        %v997 = vmul.f32 %v996, 0.6931472
        %v998 = vlog2.pop %v954
        %v999 = vmul.f32 %v998, 0.6931472
        %v1000 = vlog2.pop %v955
        %v1001 = vmul.f32 %v1000, 0.6931472
        %v1002 = vlog2.pop %v956
        %v1003 = vmul.f32 %v1002, 0.6931472
        %v1004 = vlog2.pop %v957
        %v1005 = vmul.f32 %v1004, 0.6931472
        %v1006 = vlog2.pop %v958
        %v1007 = vmul.f32 %v1006, 0.6931472
        %v1008 = vlog2.pop %v959
        %v1009 = vmul.f32 %v1008, 0.6931472
        %v1010 = vlog2.pop %v960
        %v1011 = vmul.f32 %v1010, 0.6931472
        %v1012 = vlog2.pop %v961
        %v1013 = vmul.f32 %v1012, 0.6931472
        %v1014 = vlog2.pop %v962
        %v1015 = vmul.f32 %v1014, 0.6931472
        %v1016 = vlog2.pop %v963
        %v1017 = vmul.f32 %v1016, 0.6931472
        %v1018 = vlog2.pop %v964
        %v1019 = vmul.f32 %v1018, 0.6931472
        %v1020 = vlog2.pop %v965
        %v1021 = vmul.f32 %v1020, 0.6931472
        %v1022 = vlog2.pop %v966
        %v1023 = vmul.f32 %v1022, 0.6931472
        %v1024 = vlog2.pop %v967
        %v1025 = vmul.f32 %v1024, 0.6931472
        %v1026 = vlog2.pop %v968
        %v1027 = vmul.f32 %v1026, 0.6931472
        %v1028 = vlog2.pop %v969
        %v1029 = vmul.f32 %v1028, 0.6931472
        %v1030 = vlog2.pop %v970
        %v1031 = vmul.f32 %v1030, 0.6931472
        %v1032 = vlog2.pop %v971
        %v1033 = vmul.f32 %v1032, 0.6931472
        %v1034 = vlog2.pop %v972
        %v1035 = vmul.f32 %v1034, 0.6931472
        %v1036 = vlog2.pop %v973
        %v1037 = vmul.f32 %v1036, 0.6931472
        %v1038 = vsub.f32 0.0, %v975
        %v1039 = vsub.f32 0.0, %v977
        %v1040 = vsub.f32 0.0, %v979
        %v1041 = vsub.f32 0.0, %v981
        %v1042 = vsub.f32 0.0, %v983
        %v1043 = vsub.f32 0.0, %v985
        %v1044 = vsub.f32 0.0, %v987
        %v1045 = vsub.f32 0.0, %v989
        %v1046 = vsub.f32 0.0, %v991
        %v1047 = vsub.f32 0.0, %v993
        %v1048 = vsub.f32 0.0, %v995
        %v1049 = vsub.f32 0.0, %v997
        %v1050 = vsub.f32 0.0, %v999
        %v1051 = vsub.f32 0.0, %v1001
        %v1052 = vsub.f32 0.0, %v1003
        %v1053 = vsub.f32 0.0, %v1005
        %v1054 = vsub.f32 0.0, %v1007
        %v1055 = vsub.f32 0.0, %v1009
        %v1056 = vsub.f32 0.0, %v1011
        %v1057 = vsub.f32 0.0, %v1013
        %v1058 = vsub.f32 0.0, %v1015
        %v1059 = vsub.f32 0.0, %v1017
        %v1060 = vsub.f32 0.0, %v1019
        %v1061 = vsub.f32 0.0, %v1021
        %v1062 = vsub.f32 0.0, %v1023
        %v1063 = vsub.f32 0.0, %v1025
        %v1064 = vsub.f32 0.0, %v1027
        %v1065 = vsub.f32 0.0, %v1029
        %v1066 = vsub.f32 0.0, %v1031
        %v1067 = vsub.f32 0.0, %v1033
        %v1068 = vsub.f32 0.0, %v1035
        %v1069 = vsub.f32 0.0, %v1037
        %v1070 = vrcp.pop -0.25
        %v1071 = vmul.f32 -0.25, %v1070
        %v1072 = vsub.f32 1.0, %v1071
        %v1073 = vmul.f32 %v1070, %v1072
        %v1074 = vadd.f32 %v1070, %v1073
        %vm1075 = vweird.f32 %v1070
        %v1076 = vsel %vm1075, %v1070, %v1074
        %v1077 = vmul.f32 %v1038, %v1076
        %v1078 = vmul.f32 %v1039, %v1076
        %v1079 = vmul.f32 %v1040, %v1076
        %v1080 = vmul.f32 %v1041, %v1076
        %v1081 = vmul.f32 %v1042, %v1076
        %v1082 = vmul.f32 %v1043, %v1076
        %v1083 = vmul.f32 %v1044, %v1076
        %v1084 = vmul.f32 %v1045, %v1076
        %v1085 = vmul.f32 %v1046, %v1076
        %v1086 = vmul.f32 %v1047, %v1076
        %v1087 = vmul.f32 %v1048, %v1076
        %v1088 = vmul.f32 %v1049, %v1076
        %v1089 = vmul.f32 %v1050, %v1076
        %v1090 = vmul.f32 %v1051, %v1076
        %v1091 = vmul.f32 %v1052, %v1076
        %v1092 = vmul.f32 %v1053, %v1076
        %v1093 = vmul.f32 %v1054, %v1076
        %v1094 = vmul.f32 %v1055, %v1076
        %v1095 = vmul.f32 %v1056, %v1076
        %v1096 = vmul.f32 %v1057, %v1076
        %v1097 = vmul.f32 %v1058, %v1076
        %v1098 = vmul.f32 %v1059, %v1076
        %v1099 = vmul.f32 %v1060, %v1076
        %v1100 = vmul.f32 %v1061, %v1076
        %v1101 = vmul.f32 %v1062, %v1076
        %v1102 = vmul.f32 %v1063, %v1076
        %v1103 = vmul.f32 %v1064, %v1076
        %v1104 = vmul.f32 %v1065, %v1076
        %v1105 = vmul.f32 %v1066, %v1076
        %v1106 = vmul.f32 %v1067, %v1076
        %v1107 = vmul.f32 %v1068, %v1076
        %v1108 = vmul.f32 %v1069, %v1076
        %v1109 = vpack.c.bf16 %v1078, %v1077
        %v1110 = vpack.c.bf16 %v1080, %v1079
        %v1111 = vpack.c.bf16 %v1082, %v1081
        %v1112 = vpack.c.bf16 %v1084, %v1083
        %v1113 = vpack.c.bf16 %v1086, %v1085
        %v1114 = vpack.c.bf16 %v1088, %v1087
        %v1115 = vpack.c.bf16 %v1090, %v1089
        %v1116 = vpack.c.bf16 %v1092, %v1091
        %v1117 = vpack.c.bf16 %v1094, %v1093
        %v1118 = vpack.c.bf16 %v1096, %v1095
        %v1119 = vpack.c.bf16 %v1098, %v1097
        %v1120 = vpack.c.bf16 %v1100, %v1099
        %v1121 = vpack.c.bf16 %v1102, %v1101
        %v1122 = vpack.c.bf16 %v1104, %v1103
        %v1123 = vpack.c.bf16 %v1106, %v1105
        %v1124 = vpack.c.bf16 %v1108, %v1107
        %s1125 = scalar_lea.vmem [#allocation5], 128
        %v1126 = vld [vmem:[%s1125] sm:$0xf]
        %v1127 = vld [vmem:[%s1125 + $0x4] sm:$0xf]
        %v1128 = vld [vmem:[%s1125 + $0x8] sm:$0xf]
        %v1129 = vld [vmem:[%s1125 + $0xc] sm:$0xf]
        %v1130 = vld [vmem:[%s1125 + $0x10] sm:$0xf]
        %v1131 = vld [vmem:[%s1125 + $0x14] sm:$0xf]
        %v1132 = vld [vmem:[%s1125 + $0x18] sm:$0xf]
        %v1133 = vld [vmem:[%s1125 + $0x1c] sm:$0xf]
        %v1134 = vld [vmem:[%s1125 + $0x20] sm:$0xf]
        %v1135 = vld [vmem:[%s1125 + $0x24] sm:$0xf]
        %v1136 = vld [vmem:[%s1125 + $0x28] sm:$0xf]
        %v1137 = vld [vmem:[%s1125 + $0x2c] sm:$0xf]
        %v1138 = vld [vmem:[%s1125 + $0x30] sm:$0xf]
        %v1139 = vld [vmem:[%s1125 + $0x34] sm:$0xf]
        %v1140 = vld [vmem:[%s1125 + $0x38] sm:$0xf]
        %v1141 = vld [vmem:[%s1125 + $0x3c] sm:$0xf]
        %v1142 = vld [vmem:[#allocation7 + $0x2] sm:$0x1]
        %v1143 = vperm.slane %v1142, 0
        %v1160 = vunpack.c.l.b16 %v1126
        %v1161 = vunpack.c.l.b16 %v1127
        %v1162 = vunpack.c.l.b16 %v1128
        %v1163 = vunpack.c.l.b16 %v1129
        %v1164 = vunpack.c.l.b16 %v1130
        %v1165 = vunpack.c.l.b16 %v1131
        %v1166 = vunpack.c.l.b16 %v1132
        %v1167 = vunpack.c.l.b16 %v1133
        %v1168 = vunpack.c.l.b16 %v1134
        %v1169 = vunpack.c.l.b16 %v1135
        %v1170 = vunpack.c.l.b16 %v1136
        %v1171 = vunpack.c.l.b16 %v1137
        %v1172 = vunpack.c.l.b16 %v1138
        %v1173 = vunpack.c.l.b16 %v1139
        %v1174 = vunpack.c.l.b16 %v1140
        %v1175 = vunpack.c.l.b16 %v1141
        %v1176 = vpack.c.b16 %v1161, %v1160
        %v1177 = vpack.c.b16 %v1163, %v1162
        %v1178 = vpack.c.b16 %v1165, %v1164
        %v1179 = vpack.c.b16 %v1167, %v1166
        %v1180 = vpack.c.b16 %v1169, %v1168
        %v1181 = vpack.c.b16 %v1171, %v1170
        %v1182 = vpack.c.b16 %v1173, %v1172
        %v1183 = vpack.c.b16 %v1175, %v1174
        %1192 = vmatpush.bf16.msra.mxu0 %v1183
        %1193 = vmatpush.bf16.msra.mxu0 %v1182
        %1194 = vmatpush.bf16.msra.mxu0 %v1181
        %1195 = vmatpush.bf16.msra.mxu0 %v1180
        %1196 = vmatpush.bf16.msra.mxu0 %v1179
        %1197 = vmatpush.bf16.msra.mxu0 %v1178
        %1198 = vmatpush.bf16.msra.mxu0 %v1177
        %1199 = vmatpush.bf16.msra.mxu0 %v1176
        %1200 = vmatmul.bf16.gmra.mxu0 %v1109
        %v1201 = vpop.f32.mrf.mxu0
        %v1202 = vadd.f32 %v1143, %v1201
        %v1203 = vpop.f32.mrf.mxu0
        %v1204 = vadd.f32 %v1143, %v1203
        %1205 = vmatmul.bf16.gmra.mxu0 %v1110
        %v1206 = vpop.f32.mrf.mxu0
        %v1207 = vadd.f32 %v1143, %v1206
        %v1208 = vpop.f32.mrf.mxu0
        %v1209 = vadd.f32 %v1143, %v1208
        %1210 = vmatmul.bf16.gmra.mxu0 %v1111
        %v1211 = vpop.f32.mrf.mxu0
        %v1212 = vadd.f32 %v1143, %v1211
        %v1213 = vpop.f32.mrf.mxu0
        %v1214 = vadd.f32 %v1143, %v1213
        %1215 = vmatmul.bf16.gmra.mxu0 %v1112
        %v1216 = vpop.f32.mrf.mxu0
        %v1217 = vadd.f32 %v1143, %v1216
        %v1218 = vpop.f32.mrf.mxu0
        %v1219 = vadd.f32 %v1143, %v1218
        %1220 = vmatmul.bf16.gmra.mxu0 %v1113
        %v1221 = vpop.f32.mrf.mxu0
        %v1222 = vadd.f32 %v1143, %v1221
        %v1223 = vpop.f32.mrf.mxu0
        %v1224 = vadd.f32 %v1143, %v1223
        %1225 = vmatmul.bf16.gmra.mxu0 %v1114
        %v1226 = vpop.f32.mrf.mxu0
        %v1227 = vadd.f32 %v1143, %v1226
        %v1228 = vpop.f32.mrf.mxu0
        %v1229 = vadd.f32 %v1143, %v1228
        %1230 = vmatmul.bf16.gmra.mxu0 %v1115
        %v1231 = vpop.f32.mrf.mxu0
        %v1232 = vadd.f32 %v1143, %v1231
        %v1233 = vpop.f32.mrf.mxu0
        %v1234 = vadd.f32 %v1143, %v1233
        %1235 = vmatmul.bf16.gmra.mxu0 %v1116
        %v1236 = vpop.f32.mrf.mxu0
        %v1237 = vadd.f32 %v1143, %v1236
        %v1238 = vpop.f32.mrf.mxu0
        %v1239 = vadd.f32 %v1143, %v1238
        %1240 = vmatmul.bf16.gmra.mxu0 %v1117
        %v1241 = vpop.f32.mrf.mxu0
        %v1242 = vadd.f32 %v1143, %v1241
        %v1243 = vpop.f32.mrf.mxu0
        %v1244 = vadd.f32 %v1143, %v1243
        %1245 = vmatmul.bf16.gmra.mxu0 %v1118
        %v1246 = vpop.f32.mrf.mxu0
        %v1247 = vadd.f32 %v1143, %v1246
        %v1248 = vpop.f32.mrf.mxu0
        %v1249 = vadd.f32 %v1143, %v1248
        %1250 = vmatmul.bf16.gmra.mxu0 %v1119
        %v1251 = vpop.f32.mrf.mxu0
        %v1252 = vadd.f32 %v1143, %v1251
        %v1253 = vpop.f32.mrf.mxu0
        %v1254 = vadd.f32 %v1143, %v1253
        %1255 = vmatmul.bf16.gmra.mxu0 %v1120
        %v1256 = vpop.f32.mrf.mxu0
        %v1257 = vadd.f32 %v1143, %v1256
        %v1258 = vpop.f32.mrf.mxu0
        %v1259 = vadd.f32 %v1143, %v1258
        %1260 = vmatmul.bf16.gmra.mxu0 %v1121
        %v1261 = vpop.f32.mrf.mxu0
        %v1262 = vadd.f32 %v1143, %v1261
        %v1263 = vpop.f32.mrf.mxu0
        %v1264 = vadd.f32 %v1143, %v1263
        %1265 = vmatmul.bf16.gmra.mxu0 %v1122
        %v1266 = vpop.f32.mrf.mxu0
        %v1267 = vadd.f32 %v1143, %v1266
        %v1268 = vpop.f32.mrf.mxu0
        %v1269 = vadd.f32 %v1143, %v1268
        %1270 = vmatmul.bf16.gmra.mxu0 %v1123
        %v1271 = vpop.f32.mrf.mxu0
        %v1272 = vadd.f32 %v1143, %v1271
        %v1273 = vpop.f32.mrf.mxu0
        %v1274 = vadd.f32 %v1143, %v1273
        %1275 = vmatmul.bf16.gmra.mxu0 %v1124
        %v1276 = vpop.f32.mrf.mxu0
        %v1277 = vadd.f32 %v1143, %v1276
        %v1278 = vpop.f32.mrf.mxu0
        %v1279 = vadd.f32 %v1143, %v1278
        %1280 = vdwg.mxu0
        %1281 = vst [vmem:[%s221] sm:$0xff] %v1202
        %1282 = vst [vmem:[%s221 + $0x8] sm:$0xff] %v1204
        %1283 = vst [vmem:[%s221 + $0x10] sm:$0xff] %v1207
        %1284 = vst [vmem:[%s221 + $0x18] sm:$0xff] %v1209
        %1285 = vst [vmem:[%s221 + $0x20] sm:$0xff] %v1212
        %1286 = vst [vmem:[%s221 + $0x28] sm:$0xff] %v1214
        %1287 = vst [vmem:[%s221 + $0x30] sm:$0xff] %v1217
        %1288 = vst [vmem:[%s221 + $0x38] sm:$0xff] %v1219
        %1289 = vst [vmem:[%s221 + $0x40] sm:$0xff] %v1222
        %1290 = vst [vmem:[%s221 + $0x48] sm:$0xff] %v1224
        %1291 = vst [vmem:[%s221 + $0x50] sm:$0xff] %v1227
        %1292 = vst [vmem:[%s221 + $0x58] sm:$0xff] %v1229
        %1293 = vst [vmem:[%s221 + $0x60] sm:$0xff] %v1232
        %1294 = vst [vmem:[%s221 + $0x68] sm:$0xff] %v1234
        %1295 = vst [vmem:[%s221 + $0x70] sm:$0xff] %v1237
        %1296 = vst [vmem:[%s221 + $0x78] sm:$0xff] %v1239
        %1297 = vst [vmem:[%s221 + $0x80] sm:$0xff] %v1242
        %1298 = vst [vmem:[%s221 + $0x88] sm:$0xff] %v1244
        %1299 = vst [vmem:[%s221 + $0x90] sm:$0xff] %v1247
        %1300 = vst [vmem:[%s221 + $0x98] sm:$0xff] %v1249
        %1301 = vst [vmem:[%s221 + $0xa0] sm:$0xff] %v1252
        %1302 = vst [vmem:[%s221 + $0xa8] sm:$0xff] %v1254
        %1303 = vst [vmem:[%s221 + $0xb0] sm:$0xff] %v1257
        %1304 = vst [vmem:[%s221 + $0xb8] sm:$0xff] %v1259
        %1305 = vst [vmem:[%s221 + $0xc0] sm:$0xff] %v1262
        %1306 = vst [vmem:[%s221 + $0xc8] sm:$0xff] %v1264
        %1307 = vst [vmem:[%s221 + $0xd0] sm:$0xff] %v1267
        %1308 = vst [vmem:[%s221 + $0xd8] sm:$0xff] %v1269
        %1309 = vst [vmem:[%s221 + $0xe0] sm:$0xff] %v1272
        %1310 = vst [vmem:[%s221 + $0xe8] sm:$0xff] %v1274
        %1311 = vst [vmem:[%s221 + $0xf0] sm:$0xff] %v1277
        %1312 = vst [vmem:[%s221 + $0xf8] sm:$0xff] %v1279
        %s1313 = sand.u32 %s97, 1
        %s1314 = scalar_lea.sflag [#allocation4], %s1313
        %s1315 = sand.u32 %s97, 1
        %s1316 = smul.addr %s1315, 256
        %s1317 = scalar_lea.vmem [#allocation8], %s1316
        // Predicated region
        $region45: #{tpu_custom_call.1} parent=31 // pred_check
          %p1318 = pneg %p107
        $region46: #{tpu_custom_call.1} parent=31 // pred_check_branch
          %1320 = sbr.rel (%p1318) target = $region48
        $region47: #{tpu_custom_call.1} parent=31 // pred_region
          %s1321 = smul.u32 32, %s21
          %1323 = vsyncadd %s1314, 0
          %s1324 = smul.addr %s1321, 8
          %s1325 = scalar_lea.hbm %s3, %s1324
          %s1326 = sshll.u32 %s1317, 4
          %s1327 = int_to_ptr.vmem [resolvable:$true] %s1326
          %s1328 = sshll.u32 %s1325, 4
          %s1329 = int_to_ptr.hbm [resolvable:$true] %s1328
          %1334 = dma.vmem_to_hbm [thread:$0]  %s1327, 4096, %s1329, %s1314, 128, 128, 8
        $region48: #{tpu_custom_call.1} parent=31 // pred_fallthru
          _
      $region32: #{tpu_custom_call.1} parent=5 // pred_fallthru
        _
      %p1335 = scmp.le.s32.totalorder 2, %s16
      // Predicated region
      $region49: #{tpu_custom_call.1} parent=5 // pred_check
        %p1336 = pneg %p1335
      $region50: #{tpu_custom_call.1} parent=5 // pred_check_branch
        %1338 = sbr.rel (%p1336) target = $region52
      $region51: #{tpu_custom_call.1} parent=5 // pred_region
        %s1339 = ssub.s32 %s16, 2
        // Predicated region
        $region53: #{tpu_custom_call.1} parent=51 // pred_check
          %p1340 = pneg %p113
        $region54: #{tpu_custom_call.1} parent=51 // pred_check_branch
          %1342 = sbr.rel (%p1340) target = $region56
        $region55: #{tpu_custom_call.1} parent=51 // pred_region
          %s1343 = sand.u32 %s98, 1
          %s1344 = scalar_lea.sflag [#allocation4], %s1343
          %s1345 = sand.u32 %s98, 1
          %s1346 = smul.addr %s1345, 256
          %s1347 = scalar_lea.vmem [#allocation8], %s1346
          %1349 = dma.done %s1344, 4096
        $region56: #{tpu_custom_call.1} parent=51 // pred_fallthru
          _
      $region52: #{tpu_custom_call.1} parent=5 // pred_fallthru
        _
    $region6: #{tpu_custom_call.1} parent=1 // loop_footer
      %s20 = sadd.s32 1, %s16
    $region7: #{tpu_custom_call.1} parent=1 // loop_footer_branch
      %15 = sbr.rel target = $region3
    $region8: #{tpu_custom_call.1} parent=1 // loop_exit
      _
    %1350 = vsyncpa [#allocation3], 1
    %s1351 = scalar_lea.sflag [#allocation3], 1
    %1352 = vsyncpa %s1351, 1
    %1353 = vsyncpa [#allocation6], 1
    %1354 = vsyncpa [#allocation4], 1
    %s1355 = scalar_lea.sflag [#allocation4], 1
    %1356 = vsyncpa %s1355, 1

</llo_original>
